<compile_context>
chip_gen: v7x
topology: tpu7x:2x2x1
jax: 0.10.0
libtpu: 0.0.40
codegen_flags: <defaults>
</compile_context>

<pallas_src>
import functools

import jax
import jax.numpy as jnp
from jax.experimental import pallas as pl
from jax.experimental.pallas import tpu as pltpu


_TAPS = tuple((dy, dx) for dy in (-1, 0, 1) for dx in (-1, 0, 1))
_CENTER_TAP = 4                  # (dy, dx) == (0, 0)
_BF16_SUBLANE_PACK = 16          # bf16 rows per (16, 128) packed vreg tile


def _round_up(v, m):
    return (v + m - 1) // m * m


@functools.lru_cache(maxsize=None)
def _roll_sign():
    """Sign such that pltpu.roll(v, (sign*s) % n, axis)[..., i] == v[..., (i + s) % n].

    One cached 8x256 probe kernel at first build pins the compiled lane-rotate
    convention (the review's "validate once" option); zero steady-state cost."""
    def probe(x_ref, o_ref):
        o_ref[...] = pltpu.roll(x_ref[...], 1, 1)

    x = jnp.broadcast_to(jnp.arange(256, dtype=jnp.float32), (8, 256))
    r = pl.pallas_call(probe, out_shape=jax.ShapeDtypeStruct((8, 256), jnp.float32))(x)
    return -1 if float(r[0, 0]) == 255.0 else 1


def _make_kernel(H, W, Nb, Cinp, Coutp, Cout):
    HW = H * W
    sign = _roll_sign()

    def kernel(mask_ref, x_ref, w1s_ref, b1s_ref, w2_ref, b2_ref, o_ref, p_ref):
        # mask_ref: (9, HW) bf16 0/1            x_ref : (Nb, Cinp, HW) f32
        # w1s_ref : (Coutp+Cout, 9*Cinp) bf16   b1s_ref: (Coutp+Cout, 1) f32
        # w2_ref  : (Cout, 9*Coutp) bf16        b2_ref : (Cout, 1) f32
        # o_ref   : (Nb, Cout, HW) f32          p_ref  : (9*max(Cinp,Coutp), Nb*HW) bf16

        def im2col(v, c, b):
            # v: (c, HW) bf16 for sample b.  Writes tap slab rows [t*c, (t+1)*c) of the
            # shared patch scratch into columns [b*HW, (b+1)*HW).  Valid ONLY for
            # 3x3 / pad 1 / stride 1 (lane-wrap positions == masked border positions).
            for t, (dy, dx) in enumerate(_TAPS):
                s = dy * W + dx
                rows = slice(t * c, (t + 1) * c)
                cols = slice(b * HW, (b + 1) * HW)
                if s == 0:
                    p_ref[rows, cols] = v
                else:
                    shifted = pltpu.roll(v, (sign * s) % HW, 1)      # XLU lane rotate
                    # 0/1 bf16 multiplier (values are finite, so 0*x is exact 0).
                    p_ref[rows, cols] = shifted * mask_ref[t:t + 1, :]

        # ---- im2col of x (bf16 cast once per sample) for conv1 + fused shortcut ----
        for b in range(Nb):
            im2col(x_ref[b].astype(jnp.bfloat16), Cinp, b)

        # ---- one MXU pass: rows [0,Coutp) = conv1(+BN1), rows [Coutp,...) = shortcut ----
        r = jnp.dot(w1s_ref[...], p_ref[: 9 * Cinp, :],
                    preferred_element_type=jnp.float32) + b1s_ref[...]
        h1 = jnp.maximum(r[:Coutp], 0.0).astype(jnp.bfloat16)        # (Coutp, Nb*HW)
        sc = r[Coutp:]                                               # (Cout,  Nb*HW) f32

        # ---- im2col of h1 for conv2 (reuses the same patch scratch) ----
        for b in range(Nb):
            im2col(h1[:, b * HW:(b + 1) * HW], Coutp, b)

        # ---- conv2 (+ folded BN2), residual add, final ReLU ----
        left = jnp.dot(w2_ref[...], p_ref[: 9 * Coutp, :],
                       preferred_element_type=jnp.float32) + b2_ref[...]
        out = jnp.maximum(left + sc, 0.0)
        for b in range(Nb):
            o_ref[b] = out[:, b * HW:(b + 1) * HW].astype(o_ref.dtype)

    return kernel


def _pick_samples_per_step(N):
    # Batch samples per grid step to amortize per-step overhead / mask-bias broadcasts,
    # but keep >= 2 parallel grid steps so both v7x TensorCores get work.
    for nb in (8, 4, 2):
        if N % nb == 0 and N // nb >= 2:
            return nb
    return 1


def residual_block_2d(x_nchw, params, *, samples_per_step=None):
    """Fused ResidualBlock2D forward.  x_nchw: (N, Cin, H, W) f32 -> (N, Cout, H, W) f32.

    params (BN already folded, see fold_conv_bn):
      w1: (3,3,Cin,Cout) HWIO   b1: (Cout,)
      w2: (3,3,Cout,Cout)       b2: (Cout,)
      ws: (1,1,Cin,Cout)        bs: (Cout,)
    """
    N, Cin, H, W = x_nchw.shape
    Cout = params["w1"].shape[-1]
    HW = H * W
    f32, bf16 = jnp.float32, jnp.bfloat16

    Nb = samples_per_step or _pick_samples_per_step(N)
    assert N % Nb == 0

    # Channel dims padded to the bf16 sublane pack so every im2col tap slab is a whole
    # (16,128) tile (no-op when Cin/Cout are already multiples of 16).
    align = _BF16_SUBLANE_PACK
    Cinp, Coutp = _round_up(Cin, align), _round_up(Cout, align)

    # ---- trace-time weight prep (K ordering = tap-major: K = t*Cpad + ci) ----
    # conv1 3x3 -> (Coutp, 9*Cinp), zero-padded channels.
    w1r = jnp.transpose(params["w1"], (3, 0, 1, 2)).reshape(Cout, 9, Cin)
    w1p = jnp.zeros((Coutp, 9, Cinp), f32).at[:Cout, :, :Cin].set(w1r)
    # shortcut 1x1 embedded in the centre-tap columns and stacked under conv1's rows.
    wsr = jnp.transpose(params["ws"][0, 0], (1, 0))                     # (Cout, Cin)
    wsp = jnp.zeros((Cout, 9, Cinp), f32).at[:, _CENTER_TAP, :Cin].set(wsr)
    w1s = jnp.concatenate([w1p, wsp], 0).reshape(Coutp + Cout, 9 * Cinp).astype(bf16)
    b1s = jnp.concatenate([
        jnp.zeros((Coutp,), f32).at[:Cout].set(params["b1"].astype(f32)),
        params["bs"].astype(f32)]).reshape(Coutp + Cout, 1)
    # conv2 3x3 -> (Cout, 9*Coutp).
    w2r = jnp.transpose(params["w2"], (3, 0, 1, 2)).reshape(Cout, 9, Cout)
    w2t = (jnp.zeros((Cout, 9, Coutp), f32).at[:, :, :Cout].set(w2r)
           .reshape(Cout, 9 * Coutp).astype(bf16))
    b2 = params["b2"].reshape(Cout, 1).astype(f32)

    # Border masks per tap, precomputed once at trace time (bf16 0/1 multipliers),
    # passed with a constant index_map so they stay resident in VMEM.
    pos = jnp.arange(HW)
    py, px = pos // W, pos % W
    mask = jnp.stack([((py + dy >= 0) & (py + dy < H) & (px + dx >= 0) & (px + dx < W))
                      for dy, dx in _TAPS]).astype(bf16)                # (9, HW)

    # NCHW -> (N, Cinp, HW): the reshape is free (HW already contiguous); the channel pad
    # (toy shapes only) keeps tap slab stores tile-aligned.
    x_flat = x_nchw.reshape(N, Cin, HW).astype(f32)
    if Cinp != Cin:
        x_flat = jnp.pad(x_flat, ((0, 0), (0, Cinp - Cin), (0, 0)))

    kernel = _make_kernel(H, W, Nb, Cinp, Coutp, Cout)

    def const(shape):
        return pl.BlockSpec(shape, lambda n: (0,) * len(shape))

    out = pl.pallas_call(
        kernel,
        out_shape=jax.ShapeDtypeStruct((N, Cout, HW), f32),
        grid_spec=pltpu.PrefetchScalarGridSpec(
            num_scalar_prefetch=0,
            grid=(N // Nb,),
            in_specs=[
                const((9, HW)),                                       # border masks
                pl.BlockSpec((Nb, Cinp, HW), lambda n: (n, 0, 0)),    # x
                const((Coutp + Cout, 9 * Cinp)), const((Coutp + Cout, 1)),
                const((Cout, 9 * Coutp)), const((Cout, 1)),
            ],
            out_specs=pl.BlockSpec((Nb, Cout, HW), lambda n: (n, 0, 0)),
            # One shared bf16 patch scratch, fully rewritten by each conv each step
            # (no zero-init needed).
            scratch_shapes=[pltpu.VMEM((9 * max(Cinp, Coutp), Nb * HW), bf16)],
        ),
        # Batch axis is independent -> megacore-shardable (>= 2 steps kept for v7x).
        compiler_params=pltpu.CompilerParams(dimension_semantics=("parallel",)),
    )(mask, x_flat, w1s, b1s, w2t, b2)

    return out.reshape(N, Cout, H, W)


# ---------------- parameter folding & pure-JAX reference ----------------

def fold_conv_bn(w_hwio, conv_bias, gamma, beta, mean, var, eps=1e-5):
    """Fold eval-mode BatchNorm (and the conv bias) into conv weight + per-channel bias."""
    scale = gamma / jnp.sqrt(var + eps)                    # (Cout,)
    w = (w_hwio * scale).astype(jnp.float32)               # scale output channels
    b = (beta + (conv_bias - mean) * scale).astype(jnp.float32)
    return w, b


def reference(x_nchw, p):
    """Pure-JAX reference; matmul operands cast to bf16 (f32 accumulation) to match the kernel."""
    x = jnp.transpose(x_nchw, (0, 2, 3, 1))                # NHWC
    dn = ("NHWC", "HWIO", "NHWC")

    def conv(v, w, pad):
        return jax.lax.conv_general_dilated(
            v.astype(jnp.bfloat16), w.astype(jnp.bfloat16), (1, 1), pad,
            dimension_numbers=dn, preferred_element_type=jnp.float32)

    h = jnp.maximum(conv(x, p["w1"], "SAME") + p["b1"], 0.0)
    left = conv(h, p["w2"], "SAME") + p["b2"]
    sc = conv(x, p["ws"], "VALID") + p["bs"]
    out = jnp.maximum(left + sc, 0.0)
    return jnp.transpose(out, (0, 3, 1, 2))


if __name__ == "__main__":
    key = jax.random.PRNGKey(0)
    # N=4 exercises both per-step sample batching (Nb=2) and 2 parallel grid steps.
    N, Cin, Cout, H, W = 4, 4, 8, 16, 16   # Cin != Cout -> conv shortcut path is active
    ks = jax.random.split(key, 10)

    x = jax.random.normal(ks[0], (N, Cin, H, W), jnp.float32)

    w1_raw = 0.2 * jax.random.normal(ks[1], (3, 3, Cin, Cout), jnp.float32)
    w2_raw = 0.2 * jax.random.normal(ks[2], (3, 3, Cout, Cout), jnp.float32)
    ws_raw = 0.2 * jax.random.normal(ks[3], (1, 1, Cin, Cout), jnp.float32)
    cb1 = 0.1 * jax.random.normal(ks[4], (Cout,), jnp.float32)
    cb2 = 0.1 * jax.random.normal(ks[5], (Cout,), jnp.float32)
    cbs = 0.1 * jax.random.normal(ks[6], (Cout,), jnp.float32)

    def rand_bn(k, c):
        k1, k2, k3, k4 = jax.random.split(k, 4)
        gamma = 1.0 + 0.1 * jax.random.normal(k1, (c,), jnp.float32)
        beta = 0.1 * jax.random.normal(k2, (c,), jnp.float32)
        mean = 0.1 * jax.random.normal(k3, (c,), jnp.float32)
        var = jnp.abs(jax.random.normal(k4, (c,), jnp.float32)) + 0.5
        return gamma, beta, mean, var

    w1, b1 = fold_conv_bn(w1_raw, cb1, *rand_bn(ks[7], Cout))
    w2, b2 = fold_conv_bn(w2_raw, cb2, *rand_bn(ks[8], Cout))
    ws, bs = fold_conv_bn(ws_raw, cbs, *rand_bn(ks[9], Cout))

    params = dict(w1=w1, b1=b1, w2=w2, b2=b2, ws=ws, bs=bs)

    out = jax.block_until_ready(residual_block_2d(x, params))
    ref = jax.block_until_ready(reference(x, params))

    assert out.shape == (N, Cout, H, W)
    max_err = float(jnp.max(jnp.abs(out - ref)))
    # bf16 matmul operands on both sides; loose-ish tol covers f32 accumulation-order
    # and double-rounding differences on the intermediate activation.
    assert jnp.allclose(out, ref, atol=1e-2, rtol=1e-2), max_err

    print("KERNEL_OK")
</pallas_src>

<mosaic_0001>
module attributes {stable_mosaic.version = 11 : i64} {
  func.func @probe(%arg0: memref<8x256xf32, #tpu.memory_space<vmem>>, %arg1: memref<8x256xf32, #tpu.memory_space<vmem>>) attributes {dimension_semantics = [], scalar_prefetch = 0 : i64, scratch_operands = 0 : i64, tpu.core_type = #tpu.core_type<tc>} {
    %c0 = arith.constant 0 : index
    %c0_0 = arith.constant 0 : index
    %0 = vector.load %arg0[%c0, %c0_0] : memref<8x256xf32, #tpu.memory_space<vmem>>, vector<8x256xf32>
    %c1_i32 = arith.constant 1 : i32
    %1 = tpu.dynamic_rotate %0 by %c1_i32 dim 1 : vector<8x256xf32>, i32 -> vector<8x256xf32>
    %c0_1 = arith.constant 0 : index
    %c0_2 = arith.constant 0 : index
    %2 = vector.load %arg1[%c0_1, %c0_2] : memref<8x256xf32, #tpu.memory_space<vmem>>, vector<8x256xf32>
    tpu.vector_store %arg1[%c0_1, %c0_2], %1 {strides = array<i32>} : memref<8x256xf32, #tpu.memory_space<vmem>>, vector<8x256xf32>,
    return
  }
}

</mosaic_0001>

<llo_original>
// kernel: tpu_custom_call.1
$region0: #{tpu_custom_call.1}
  #allocation0 [shape = 'u32[]', space=smem, size = 0x4, offset = 0x4, fixed_abs, tag = 'smem constant byte address 0x4 - core index']
  #allocation1 [shape = 'u32[144,128]{1,0:T(1,128)}', space=vmem, size = 0x12000, scoped, tag = 'internal scratch']
  %s0 = inlined_call_operand.hbm [shape: f32[8,256], index: 0, kind: input, shape index: {}]
  %s1 = inlined_call_operand.hbm [shape: f32[8,256], index: 1, kind: output, shape index: {}]
  %s2 = sld [smem:[#allocation0]]
  $region18: #{tpu_custom_call.1} parent=0
    _
  %s4 = ssub.s32 1, %s2
  %s5 = scalar_select 0, %s4, %s2
  $region1: #{tpu_custom_call.1} parent=0
    #allocation2 [shape = 'u8[8192]{0}', space=vmem, size = 0x2000, scoped, tag = 'input window, operand 0, single buffered']
    #allocation3 [shape = 's32[1]{0}', space=sflag, size = 0x4, scoped, tag = 'scoped memory for tpu_custom_call.1']
    #allocation4 [shape = 's32[1]{0}', space=sflag, size = 0x4, scoped, tag = 'scoped memory for tpu_custom_call.1']
    #allocation5 [shape = 'u8[8192]{0}', space=vmem, size = 0x2000, scoped, tag = 'output window, operand 0, single buffered']
    %6 = vsyncpa [#allocation3], 0
    %7 = vsyncpa [#allocation4], 0
    // Predicated region
    $region2: #{tpu_custom_call.1} parent=1 // pred_check
      _
    $region3: #{tpu_custom_call.1} parent=1 // pred_check_branch
      %9 = sbr.rel (0) target = $region5
    $region4: #{tpu_custom_call.1} parent=1 // pred_region
      %s11 = ssub.s32 256, 256
      %12 = vsyncadd [#allocation3], %s11
      %s14 = sshll.u32 [#allocation2], 4
      %s15 = int_to_ptr.vmem [resolvable:$true] %s14
      %17 = dma.hbm_to_vmem [thread:$0]  %s0, 256, %s15, [#allocation3]
    $region5: #{tpu_custom_call.1} parent=1 // pred_fallthru
      _
    // Predicated region
    $region6: #{tpu_custom_call.1} parent=1 // pred_check
      _
    $region7: #{tpu_custom_call.1} parent=1 // pred_check_branch
      %19 = sbr.rel (0) target = $region9
    $region8: #{tpu_custom_call.1} parent=1 // pred_region
      %20 = dma.done [#allocation3], 256
    $region9: #{tpu_custom_call.1} parent=1 // pred_fallthru
      _
    %v21 = vld [vmem:[#allocation2] sm:$0xff]
    %v22 = vld [vmem:[#allocation2 + $0x8] sm:$0xff]
    %23 = vrot.lane.b32.xlu0 %v21, 1
    %v24 = vpop.permute.xlu0 %23
    %25 = vrot.lane.b32.xlu0 %v22, 1
    %v26 = vpop.permute.xlu0 %25
    %v27 = vlaneseq
    %v28 = vand.u32 %v27, 127
    %vm29 = vcmp.lt.s32.totalorder %v28, 1
    %v30 = vsel %vm29, %v24, %v26
    %v31 = vsel %vm29, %v26, %v24
    %32 = vst [vmem:[#allocation5] sm:$0xff] %v31
    %33 = vst [vmem:[#allocation5 + $0x8] sm:$0xff] %v30
    // Predicated region
    $region10: #{tpu_custom_call.1} parent=1 // pred_check
      _
    $region11: #{tpu_custom_call.1} parent=1 // pred_check_branch
      %35 = sbr.rel (0) target = $region13
    $region12: #{tpu_custom_call.1} parent=1 // pred_region
      %s37 = ssub.s32 256, 256
      %38 = vsyncadd [#allocation4], %s37
      %s40 = sshll.u32 [#allocation5], 4
      %s41 = int_to_ptr.vmem [resolvable:$true] %s40
      %43 = dma.vmem_to_hbm [thread:$0]  %s41, 256, %s1, [#allocation4]
    $region13: #{tpu_custom_call.1} parent=1 // pred_fallthru
      _
    // Predicated region
    $region14: #{tpu_custom_call.1} parent=1 // pred_check
      _
    $region15: #{tpu_custom_call.1} parent=1 // pred_check_branch
      %45 = sbr.rel (0) target = $region17
    $region16: #{tpu_custom_call.1} parent=1 // pred_region
      %46 = dma.done [#allocation4], 256
    $region17: #{tpu_custom_call.1} parent=1 // pred_fallthru
      _
    %47 = vsyncpa [#allocation3], 1
    %48 = vsyncpa [#allocation4], 1

</llo_original>
